<compile_context>
chip_gen: v7x
topology: tpu7x:2x2x1
jax: 0.10.0
libtpu: 0.0.40
codegen_flags: <defaults>
</compile_context>

<pallas_src>
import functools

import jax
import jax.numpy as jnp
from jax.experimental import pallas as pl
from jax.experimental.pallas import tpu as pltpu  # noqa: F401  (imported for TPU backend)

# ---------------- model config (small, consistent with the module) ----------------
B = 16            # batch
IN_DIM = 16       # input_dim
D_MODEL = 32      # d_model
N_HEAD = 4        # nhead (with seq_len==1 the result is head-count invariant)
D_FF = 64         # dim_feedforward
N_LAYERS = 2      # num_layers
H_OUT = 64        # hidden of output head (hardcoded 64 in the module)
LANES = 128       # lane width of the packed slabs / output
OUT_PAD = 128     # lane-dense output slab width (real output is column 0)
EPS = 1e-5        # PyTorch LayerNorm default eps

# ---------------- static row offsets into the packed slabs ----------------
# weight slab: (W_ROWS, 128); every block starts at a sublane-aligned (mult-of-8) row.
_r = 0
R_W0 = _r; _r += IN_DIM                     # folded input-proj @ (I + attn_0)   (16, 32)
R_WATTN = {}
for _l in range(1, N_LAYERS):
    R_WATTN[_l] = _r; _r += D_MODEL         # folded attention+residual map      (32, 32)
R_W1, R_W2 = {}, {}
for _l in range(N_LAYERS):
    R_W1[_l] = _r; _r += D_MODEL            # FF up                              (32, 64)
    R_W2[_l] = _r; _r += D_FF               # FF down                            (64, 32)
R_WH = _r; _r += D_MODEL                    # output head hidden                 (32, 64)
R_WOUT = _r; _r += H_OUT                    # lane-replicated final Linear       (64,128)
W_ROWS = _r                                 # = 336, multiple of 8

# bias / gain slab: (V_ROWS, 128); one vector per row, zero padded to 128 lanes.
_v = 0
V_B0 = _v; _v += 1
V_BATTN = {}
for _l in range(1, N_LAYERS):
    V_BATTN[_l] = _v; _v += 1
V_G1, V_BE1, V_B1, V_B2, V_G2, V_BE2 = {}, {}, {}, {}, {}, {}
for _l in range(N_LAYERS):
    V_G1[_l] = _v; _v += 1
    V_BE1[_l] = _v; _v += 1
    V_B1[_l] = _v; _v += 1
    V_B2[_l] = _v; _v += 1
    V_G2[_l] = _v; _v += 1
    V_BE2[_l] = _v; _v += 1
V_BH = _v; _v += 1
V_BOUT = _v; _v += 1
V_ROWS = -(-_v // 8) * 8                    # = 16, multiple of 8


def transformer_kernel(x_ref, w_ref, v_ref, out_ref):
    x = x_ref[...]                                                     # (B, IN_DIM)

    # layer 0: input projection + attention + residual pre-folded into one affine map
    h1 = (jnp.dot(x, w_ref[R_W0:R_W0 + IN_DIM, :D_MODEL],
                  preferred_element_type=jnp.float32)
          + v_ref[V_B0:V_B0 + 1, :D_MODEL])                            # (B, D)

    h = h1  # placeholder; overwritten at end of each layer
    for l in range(N_LAYERS):                                          # static unrolled loop
        if l > 0:
            # attention + residual folded:  h1 = h @ (I + wv@wo) + (bv@wo + bo)
            h1 = (jnp.dot(h, w_ref[R_WATTN[l]:R_WATTN[l] + D_MODEL, :D_MODEL],
                          preferred_element_type=jnp.float32)
                  + v_ref[V_BATTN[l]:V_BATTN[l] + 1, :D_MODEL])

        # --- LayerNorm 1: independent mean / E[x^2] reductions (overlapping XLU reduces) ---
        mu = jnp.mean(h1, axis=-1, keepdims=True)
        ms = jnp.mean(h1 * h1, axis=-1, keepdims=True)
        var = ms - mu * mu
        h1 = ((h1 - mu) * jax.lax.rsqrt(var + EPS)
              * v_ref[V_G1[l]:V_G1[l] + 1, :D_MODEL]
              + v_ref[V_BE1[l]:V_BE1[l] + 1, :D_MODEL])

        # --- feed forward (ReLU, PyTorch default), residual, LayerNorm 2 ---
        ff = (jnp.dot(h1, w_ref[R_W1[l]:R_W1[l] + D_MODEL, :D_FF],
                      preferred_element_type=jnp.float32)
              + v_ref[V_B1[l]:V_B1[l] + 1, :D_FF])
        ff = jnp.maximum(ff, 0.0)
        ff = (jnp.dot(ff, w_ref[R_W2[l]:R_W2[l] + D_FF, :D_MODEL],
                      preferred_element_type=jnp.float32)
              + v_ref[V_B2[l]:V_B2[l] + 1, :D_MODEL])
        h2 = h1 + ff
        mu = jnp.mean(h2, axis=-1, keepdims=True)
        ms = jnp.mean(h2 * h2, axis=-1, keepdims=True)
        var = ms - mu * mu
        h = ((h2 - mu) * jax.lax.rsqrt(var + EPS)
             * v_ref[V_G2[l]:V_G2[l] + 1, :D_MODEL]
             + v_ref[V_BE2[l]:V_BE2[l] + 1, :D_MODEL])

    # mean over the length-1 seq dim == identity; output head
    z = (jnp.dot(h, w_ref[R_WH:R_WH + D_MODEL, :H_OUT],
                 preferred_element_type=jnp.float32)
         + v_ref[V_BH:V_BH + 1, :H_OUT])                               # (B, 64)
    z = jnp.maximum(z, 0.0)
    # final Linear(64 -> 1) as a lane-replicated MXU matmul; result written straight to the
    # (B, 128) output slab => unmasked lane-dense vst, no XLU reduce on the tail.
    out_ref[...] = (jnp.dot(z, w_ref[R_WOUT:R_WOUT + H_OUT, :],
                            preferred_element_type=jnp.float32)
                    + v_ref[V_BOUT:V_BOUT + 1, :])


def pack_params(params):
    """One-time host/XLA-side algebraic folding + packing into 2 lane-dense slabs."""
    (wp, bp, pos, wv, bv, wo, bo, w1, b1, w2, b2,
     g1, be1, g2, be2, wh, bh, wout, bout) = params
    hdot = functools.partial(jnp.dot, precision="highest")
    eye = jnp.eye(D_MODEL, dtype=jnp.float32)

    # attention + residual pre-fold (exact for seq_len==1, eval-mode dropout):
    #   softmax over one key == 1  =>  attn = h @ (wv@wo) + (bv@wo + bo)
    #   h1 = h + attn = h @ (I + wv@wo) + (bv@wo + bo)
    wattn = [eye + hdot(wv[l], wo[l]) for l in range(N_LAYERS)]
    battn = [hdot(bv[l], wo[l]) + bo[l] for l in range(N_LAYERS)]

    # fuse input-proj bias + positional encoding, then fold the whole input projection
    # through layer 0's (residual-folded) attention map
    b0 = bp + pos
    w0p = hdot(wp, wattn[0])                    # (IN_DIM, D_MODEL)
    b0p = hdot(b0, wattn[0]) + battn[0]         # (1, D_MODEL)

    # final Linear(64 -> 1) weight replicated across all 128 output lanes
    wout128 = jnp.broadcast_to(wout.reshape(H_OUT, 1), (H_OUT, OUT_PAD))
    bout128 = jnp.broadcast_to(bout, (1, OUT_PAD))

    W = jnp.zeros((W_ROWS, LANES), jnp.float32)
    W = W.at[R_W0:R_W0 + IN_DIM, :D_MODEL].set(w0p)
    for l in range(1, N_LAYERS):
        W = W.at[R_WATTN[l]:R_WATTN[l] + D_MODEL, :D_MODEL].set(wattn[l])
    for l in range(N_LAYERS):
        W = W.at[R_W1[l]:R_W1[l] + D_MODEL, :D_FF].set(w1[l])
        W = W.at[R_W2[l]:R_W2[l] + D_FF, :D_MODEL].set(w2[l])
    W = W.at[R_WH:R_WH + D_MODEL, :H_OUT].set(wh)
    W = W.at[R_WOUT:R_WOUT + H_OUT, :].set(wout128)

    V = jnp.zeros((V_ROWS, LANES), jnp.float32)
    V = V.at[V_B0, :D_MODEL].set(b0p[0])
    for l in range(1, N_LAYERS):
        V = V.at[V_BATTN[l], :D_MODEL].set(battn[l][0])
    for l in range(N_LAYERS):
        V = V.at[V_G1[l], :D_MODEL].set(g1[l, 0])
        V = V.at[V_BE1[l], :D_MODEL].set(be1[l, 0])
        V = V.at[V_B1[l], :D_FF].set(b1[l, 0])
        V = V.at[V_B2[l], :D_MODEL].set(b2[l, 0])
        V = V.at[V_G2[l], :D_MODEL].set(g2[l, 0])
        V = V.at[V_BE2[l], :D_MODEL].set(be2[l, 0])
    V = V.at[V_BH, :H_OUT].set(bh[0])
    V = V.at[V_BOUT, :].set(bout128[0])
    return W, V


def transformer_forward(x, params):
    W, V = pack_params(params)

    nbytes = (x.size + W.size + V.size + B * OUT_PAD) * 4
    flops = 2 * B * (IN_DIM * D_MODEL
                     + (N_LAYERS - 1) * D_MODEL * D_MODEL
                     + N_LAYERS * 2 * D_MODEL * D_FF
                     + D_MODEL * H_OUT + H_OUT * OUT_PAD)

    # Gridless single invocation: at B=16 a grid (even a 'parallel' one for v7x's 2 TCs)
    # only adds per-step overhead.  Raise B per call (>=128 rows) before adding a row grid.
    out_padded = pl.pallas_call(
        transformer_kernel,
        out_shape=jax.ShapeDtypeStruct((B, OUT_PAD), jnp.float32),
        cost_estimate=pl.CostEstimate(flops=flops,
                                      transcendentals=4 * B,      # rsqrt per LN per row
                                      bytes_accessed=nbytes),
    )(x, W, V)
    return out_padded[:, :1]


def init_params(key):
    ks = jax.random.split(key, 32)
    n = lambda k, s, scale=0.1: (scale * jax.random.normal(k, s)).astype(jnp.float32)
    # input projection, pre-transposed to (in, out)
    wp = n(ks[0], (IN_DIM, D_MODEL))
    bp = n(ks[1], (1, D_MODEL))
    pos = n(ks[2], (1, D_MODEL))            # positional_encoding (1,1,d_model) -> (1,d_model)
    # per-layer params, stacked along a leading layer axis
    wv = n(ks[3], (N_LAYERS, D_MODEL, D_MODEL))   # V slice of in_proj (Q,K unused at seq_len==1)
    bv = n(ks[4], (N_LAYERS, 1, D_MODEL))
    wo = n(ks[5], (N_LAYERS, D_MODEL, D_MODEL))   # attention out_proj
    bo = n(ks[6], (N_LAYERS, 1, D_MODEL))
    w1 = n(ks[7], (N_LAYERS, D_MODEL, D_FF))
    b1 = n(ks[8], (N_LAYERS, 1, D_FF))
    w2 = n(ks[9], (N_LAYERS, D_FF, D_MODEL))
    b2 = n(ks[10], (N_LAYERS, 1, D_MODEL))
    g1 = jnp.ones((N_LAYERS, 1, D_MODEL), jnp.float32)
    be1 = jnp.zeros((N_LAYERS, 1, D_MODEL), jnp.float32)
    g2 = jnp.ones((N_LAYERS, 1, D_MODEL), jnp.float32)
    be2 = jnp.zeros((N_LAYERS, 1, D_MODEL), jnp.float32)
    # output head
    wh = n(ks[11], (D_MODEL, H_OUT))
    bh = n(ks[12], (1, H_OUT))
    wout = n(ks[13], (1, H_OUT))              # Linear(64 -> 1) weight, kept as a row vector
    bout = n(ks[14], (1, 1))
    return (wp, bp, pos, wv, bv, wo, bo, w1, b1, w2, b2,
            g1, be1, g2, be2, wh, bh, wout, bout)


def reference_forward(x, params):
    """Pure-JAX reference of the ORIGINAL (unfolded) module math, seq_len==1 folded away."""
    (wp, bp, pos, wv, bv, wo, bo, w1, b1, w2, b2,
     g1, be1, g2, be2, wh, bh, wout, bout) = params
    dot = functools.partial(jnp.dot, precision="highest")
    h = dot(x, wp) + bp + pos
    for l in range(N_LAYERS):
        attn = dot(dot(h, wv[l]) + bv[l], wo[l]) + bo[l]   # softmax over single key == 1
        h1 = h + attn
        mu = jnp.mean(h1, -1, keepdims=True)
        xc = h1 - mu
        h1 = xc * jax.lax.rsqrt(jnp.mean(xc * xc, -1, keepdims=True) + EPS) * g1[l] + be1[l]
        ff = dot(jnp.maximum(dot(h1, w1[l]) + b1[l], 0.0), w2[l]) + b2[l]
        h2 = h1 + ff
        mu = jnp.mean(h2, -1, keepdims=True)
        xc = h2 - mu
        h = xc * jax.lax.rsqrt(jnp.mean(xc * xc, -1, keepdims=True) + EPS) * g2[l] + be2[l]
    z = jnp.maximum(dot(h, wh) + bh, 0.0)
    return jnp.sum(z * wout, -1, keepdims=True) + bout


if __name__ == "__main__":
    key = jax.random.PRNGKey(0)
    pkey, xkey = jax.random.split(key)
    params = init_params(pkey)
    x = jax.random.normal(xkey, (B, IN_DIM), dtype=jnp.float32)

    out = transformer_forward(x, params)
    out = jax.block_until_ready(out)
    assert out.shape == (B, 1), out.shape

    ref = jax.block_until_ready(reference_forward(x, params))
    err = float(jnp.max(jnp.abs(out - ref)))
    assert jnp.allclose(out, ref, atol=2e-3, rtol=2e-3), err

    print("KERNEL_OK")
</pallas_src>

<mosaic_0001>
module attributes {stable_mosaic.version = 11 : i64} {
  func.func @transformer_kernel(%arg0: memref<16x16xf32, #tpu.memory_space<vmem>>, %arg1: memref<336x128xf32, #tpu.memory_space<vmem>>, %arg2: memref<16x128xf32, #tpu.memory_space<vmem>>, %arg3: memref<16x128xf32, #tpu.memory_space<vmem>>) attributes {dimension_semantics = [], scalar_prefetch = 0 : i64, scratch_operands = 0 : i64, tpu.core_type = #tpu.core_type<tc>} {
    %c0 = arith.constant 0 : index
    %c0_0 = arith.constant 0 : index
    %0 = vector.load %arg0[%c0, %c0_0] : memref<16x16xf32, #tpu.memory_space<vmem>>, vector<16x16xf32>
    %c0_1 = arith.constant 0 : index
    %c0_2 = arith.constant 0 : index
    %1 = vector.load %arg1[%c0_1, %c0_2] : memref<336x128xf32, #tpu.memory_space<vmem>>, vector<16x32xf32>
    %cst = arith.constant dense<0.000000e+00> : vector<16x32xf32>
    %2 = tpu.matmul %0, %1, %cst {dimension_numbers = #tpu.dot_dimension_numbers<[1], [0], [0], [1], [0, 0, 1, 1], [], []>} : vector<16x16xf32>, vector<16x32xf32>, vector<16x32xf32> -> vector<16x32xf32>
    %c0_3 = arith.constant 0 : index
    %c0_4 = arith.constant 0 : index
    %3 = vector.load %arg2[%c0_3, %c0_4] : memref<16x128xf32, #tpu.memory_space<vmem>>, vector<1x32xf32>
    %4 = vector.broadcast %3 : vector<1x32xf32> to vector<16x32xf32>
    %5 = arith.addf %2, %4 : vector<16x32xf32>
    %cst_5 = arith.constant dense<0.000000e+00> : vector<16xf32>
    %6 = vector.multi_reduction <add>, %5, %cst_5 [1] : vector<16x32xf32> to vector<16xf32>
    %7 = vector.shape_cast %6 : vector<16xf32> to vector<16x1xf32>
    %cst_6 = arith.constant 3.200000e+01 : f32
    %8 = vector.broadcast %cst_6 : f32 to vector<16x1xf32>
    %9 = arith.divf %7, %8 : vector<16x1xf32>
    %10 = arith.mulf %5, %5 : vector<16x32xf32>
    %cst_7 = arith.constant dense<0.000000e+00> : vector<16xf32>
    %11 = vector.multi_reduction <add>, %10, %cst_7 [1] : vector<16x32xf32> to vector<16xf32>
    %12 = vector.shape_cast %11 : vector<16xf32> to vector<16x1xf32>
    %cst_8 = arith.constant 3.200000e+01 : f32
    %13 = vector.broadcast %cst_8 : f32 to vector<16x1xf32>
    %14 = arith.divf %12, %13 : vector<16x1xf32>
    %15 = arith.mulf %9, %9 : vector<16x1xf32>
    %16 = arith.subf %14, %15 : vector<16x1xf32>
    %17 = vector.broadcast %9 : vector<16x1xf32> to vector<16x32xf32>
    %18 = arith.subf %5, %17 : vector<16x32xf32>
    %cst_9 = arith.constant 9.99999974E-6 : f32
    %19 = vector.broadcast %cst_9 : f32 to vector<16x1xf32>
    %20 = arith.addf %16, %19 : vector<16x1xf32>
    %21 = math.rsqrt %20 : vector<16x1xf32>
    %22 = vector.broadcast %21 : vector<16x1xf32> to vector<16x32xf32>
    %23 = arith.mulf %18, %22 : vector<16x32xf32>
    %c2 = arith.constant 2 : index
    %c0_10 = arith.constant 0 : index
    %24 = vector.load %arg2[%c2, %c0_10] : memref<16x128xf32, #tpu.memory_space<vmem>>, vector<1x32xf32>
    %25 = vector.broadcast %24 : vector<1x32xf32> to vector<16x32xf32>
    %26 = arith.mulf %23, %25 : vector<16x32xf32>
    %c3 = arith.constant 3 : index
    %c0_11 = arith.constant 0 : index
    %27 = vector.load %arg2[%c3, %c0_11] : memref<16x128xf32, #tpu.memory_space<vmem>>, vector<1x32xf32>
    %28 = vector.broadcast %27 : vector<1x32xf32> to vector<16x32xf32>
    %29 = arith.addf %26, %28 : vector<16x32xf32>
    %c48 = arith.constant 48 : index
    %c0_12 = arith.constant 0 : index
    %30 = vector.load %arg1[%c48, %c0_12] : memref<336x128xf32, #tpu.memory_space<vmem>>, vector<32x64xf32>
    %cst_13 = arith.constant dense<0.000000e+00> : vector<16x64xf32>
    %31 = tpu.matmul %29, %30, %cst_13 {dimension_numbers = #tpu.dot_dimension_numbers<[1], [0], [0], [1], [0, 0, 1, 1], [], []>} : vector<16x32xf32>, vector<32x64xf32>, vector<16x64xf32> -> vector<16x64xf32>
    %c4 = arith.constant 4 : index
    %c0_14 = arith.constant 0 : index
    %32 = vector.load %arg2[%c4, %c0_14] : memref<16x128xf32, #tpu.memory_space<vmem>>, vector<1x64xf32>
    %33 = vector.broadcast %32 : vector<1x64xf32> to vector<16x64xf32>
    %34 = arith.addf %31, %33 : vector<16x64xf32>
    %cst_15 = arith.constant 0.000000e+00 : f32
    %35 = vector.broadcast %cst_15 : f32 to vector<16x64xf32>
    %36 = arith.maximumf %34, %35 : vector<16x64xf32>
    %c80 = arith.constant 80 : index
    %c0_16 = arith.constant 0 : index
    %37 = vector.load %arg1[%c80, %c0_16] : memref<336x128xf32, #tpu.memory_space<vmem>>, vector<64x32xf32>
    %cst_17 = arith.constant dense<0.000000e+00> : vector<16x32xf32>
    %38 = tpu.matmul %36, %37, %cst_17 {dimension_numbers = #tpu.dot_dimension_numbers<[1], [0], [0], [1], [0, 0, 1, 1], [], []>} : vector<16x64xf32>, vector<64x32xf32>, vector<16x32xf32> -> vector<16x32xf32>
    %c5 = arith.constant 5 : index
    %c0_18 = arith.constant 0 : index
    %39 = vector.load %arg2[%c5, %c0_18] : memref<16x128xf32, #tpu.memory_space<vmem>>, vector<1x32xf32>
    %40 = vector.broadcast %39 : vector<1x32xf32> to vector<16x32xf32>
    %41 = arith.addf %38, %40 : vector<16x32xf32>
    %42 = arith.addf %29, %41 : vector<16x32xf32>
    %cst_19 = arith.constant dense<0.000000e+00> : vector<16xf32>
    %43 = vector.multi_reduction <add>, %42, %cst_19 [1] : vector<16x32xf32> to vector<16xf32>
    %44 = vector.shape_cast %43 : vector<16xf32> to vector<16x1xf32>
    %cst_20 = arith.constant 3.200000e+01 : f32
    %45 = vector.broadcast %cst_20 : f32 to vector<16x1xf32>
    %46 = arith.divf %44, %45 : vector<16x1xf32>
    %47 = arith.mulf %42, %42 : vector<16x32xf32>
    %cst_21 = arith.constant dense<0.000000e+00> : vector<16xf32>
    %48 = vector.multi_reduction <add>, %47, %cst_21 [1] : vector<16x32xf32> to vector<16xf32>
    %49 = vector.shape_cast %48 : vector<16xf32> to vector<16x1xf32>
    %cst_22 = arith.constant 3.200000e+01 : f32
    %50 = vector.broadcast %cst_22 : f32 to vector<16x1xf32>
    %51 = arith.divf %49, %50 : vector<16x1xf32>
    %52 = arith.mulf %46, %46 : vector<16x1xf32>
    %53 = arith.subf %51, %52 : vector<16x1xf32>
    %54 = vector.broadcast %46 : vector<16x1xf32> to vector<16x32xf32>
    %55 = arith.subf %42, %54 : vector<16x32xf32>
    %cst_23 = arith.constant 9.99999974E-6 : f32
    %56 = vector.broadcast %cst_23 : f32 to vector<16x1xf32>
    %57 = arith.addf %53, %56 : vector<16x1xf32>
    %58 = math.rsqrt %57 : vector<16x1xf32>
    %59 = vector.broadcast %58 : vector<16x1xf32> to vector<16x32xf32>
    %60 = arith.mulf %55, %59 : vector<16x32xf32>
    %c6 = arith.constant 6 : index
    %c0_24 = arith.constant 0 : index
    %61 = vector.load %arg2[%c6, %c0_24] : memref<16x128xf32, #tpu.memory_space<vmem>>, vector<1x32xf32>
    %62 = vector.broadcast %61 : vector<1x32xf32> to vector<16x32xf32>
    %63 = arith.mulf %60, %62 : vector<16x32xf32>
    %c7 = arith.constant 7 : index
    %c0_25 = arith.constant 0 : index
    %64 = vector.load %arg2[%c7, %c0_25] : memref<16x128xf32, #tpu.memory_space<vmem>>, vector<1x32xf32>
    %65 = vector.broadcast %64 : vector<1x32xf32> to vector<16x32xf32>
    %66 = arith.addf %63, %65 : vector<16x32xf32>
    %c16 = arith.constant 16 : index
    %c0_26 = arith.constant 0 : index
    %67 = vector.load %arg1[%c16, %c0_26] : memref<336x128xf32, #tpu.memory_space<vmem>>, vector<32x32xf32>
    %cst_27 = arith.constant dense<0.000000e+00> : vector<16x32xf32>
    %68 = tpu.matmul %66, %67, %cst_27 {dimension_numbers = #tpu.dot_dimension_numbers<[1], [0], [0], [1], [0, 0, 1, 1], [], []>} : vector<16x32xf32>, vector<32x32xf32>, vector<16x32xf32> -> vector<16x32xf32>
    %c1 = arith.constant 1 : index
    %c0_28 = arith.constant 0 : index
    %69 = vector.load %arg2[%c1, %c0_28] : memref<16x128xf32, #tpu.memory_space<vmem>>, vector<1x32xf32>
    %70 = vector.broadcast %69 : vector<1x32xf32> to vector<16x32xf32>
    %71 = arith.addf %68, %70 : vector<16x32xf32>
    %cst_29 = arith.constant dense<0.000000e+00> : vector<16xf32>
    %72 = vector.multi_reduction <add>, %71, %cst_29 [1] : vector<16x32xf32> to vector<16xf32>
    %73 = vector.shape_cast %72 : vector<16xf32> to vector<16x1xf32>
    %cst_30 = arith.constant 3.200000e+01 : f32
    %74 = vector.broadcast %cst_30 : f32 to vector<16x1xf32>
    %75 = arith.divf %73, %74 : vector<16x1xf32>
    %76 = arith.mulf %71, %71 : vector<16x32xf32>
    %cst_31 = arith.constant dense<0.000000e+00> : vector<16xf32>
    %77 = vector.multi_reduction <add>, %76, %cst_31 [1] : vector<16x32xf32> to vector<16xf32>
    %78 = vector.shape_cast %77 : vector<16xf32> to vector<16x1xf32>
    %cst_32 = arith.constant 3.200000e+01 : f32
    %79 = vector.broadcast %cst_32 : f32 to vector<16x1xf32>
    %80 = arith.divf %78, %79 : vector<16x1xf32>
    %81 = arith.mulf %75, %75 : vector<16x1xf32>
    %82 = arith.subf %80, %81 : vector<16x1xf32>
    %83 = vector.broadcast %75 : vector<16x1xf32> to vector<16x32xf32>
    %84 = arith.subf %71, %83 : vector<16x32xf32>
    %cst_33 = arith.constant 9.99999974E-6 : f32
    %85 = vector.broadcast %cst_33 : f32 to vector<16x1xf32>
    %86 = arith.addf %82, %85 : vector<16x1xf32>
    %87 = math.rsqrt %86 : vector<16x1xf32>
    %88 = vector.broadcast %87 : vector<16x1xf32> to vector<16x32xf32>
    %89 = arith.mulf %84, %88 : vector<16x32xf32>
    %c8 = arith.constant 8 : index
    %c0_34 = arith.constant 0 : index
    %90 = vector.load %arg2[%c8, %c0_34] : memref<16x128xf32, #tpu.memory_space<vmem>>, vector<1x32xf32>
    %91 = vector.broadcast %90 : vector<1x32xf32> to vector<16x32xf32>
    %92 = arith.mulf %89, %91 : vector<16x32xf32>
    %c9 = arith.constant 9 : index
    %c0_35 = arith.constant 0 : index
    %93 = vector.load %arg2[%c9, %c0_35] : memref<16x128xf32, #tpu.memory_space<vmem>>, vector<1x32xf32>
    %94 = vector.broadcast %93 : vector<1x32xf32> to vector<16x32xf32>
    %95 = arith.addf %92, %94 : vector<16x32xf32>
    %c144 = arith.constant 144 : index
    %c0_36 = arith.constant 0 : index
    %96 = vector.load %arg1[%c144, %c0_36] : memref<336x128xf32, #tpu.memory_space<vmem>>, vector<32x64xf32>
    %cst_37 = arith.constant dense<0.000000e+00> : vector<16x64xf32>
    %97 = tpu.matmul %95, %96, %cst_37 {dimension_numbers = #tpu.dot_dimension_numbers<[1], [0], [0], [1], [0, 0, 1, 1], [], []>} : vector<16x32xf32>, vector<32x64xf32>, vector<16x64xf32> -> vector<16x64xf32>
    %c10 = arith.constant 10 : index
    %c0_38 = arith.constant 0 : index
    %98 = vector.load %arg2[%c10, %c0_38] : memref<16x128xf32, #tpu.memory_space<vmem>>, vector<1x64xf32>
    %99 = vector.broadcast %98 : vector<1x64xf32> to vector<16x64xf32>
    %100 = arith.addf %97, %99 : vector<16x64xf32>
    %cst_39 = arith.constant 0.000000e+00 : f32
    %101 = vector.broadcast %cst_39 : f32 to vector<16x64xf32>
    %102 = arith.maximumf %100, %101 : vector<16x64xf32>
    %c176 = arith.constant 176 : index
    %c0_40 = arith.constant 0 : index
    %103 = vector.load %arg1[%c176, %c0_40] : memref<336x128xf32, #tpu.memory_space<vmem>>, vector<64x32xf32>
    %cst_41 = arith.constant dense<0.000000e+00> : vector<16x32xf32>
    %104 = tpu.matmul %102, %103, %cst_41 {dimension_numbers = #tpu.dot_dimension_numbers<[1], [0], [0], [1], [0, 0, 1, 1], [], []>} : vector<16x64xf32>, vector<64x32xf32>, vector<16x32xf32> -> vector<16x32xf32>
    %c11 = arith.constant 11 : index
    %c0_42 = arith.constant 0 : index
    %105 = vector.load %arg2[%c11, %c0_42] : memref<16x128xf32, #tpu.memory_space<vmem>>, vector<1x32xf32>
    %106 = vector.broadcast %105 : vector<1x32xf32> to vector<16x32xf32>
    %107 = arith.addf %104, %106 : vector<16x32xf32>
    %108 = arith.addf %95, %107 : vector<16x32xf32>
    %cst_43 = arith.constant dense<0.000000e+00> : vector<16xf32>
    %109 = vector.multi_reduction <add>, %108, %cst_43 [1] : vector<16x32xf32> to vector<16xf32>
    %110 = vector.shape_cast %109 : vector<16xf32> to vector<16x1xf32>
    %cst_44 = arith.constant 3.200000e+01 : f32
    %111 = vector.broadcast %cst_44 : f32 to vector<16x1xf32>
    %112 = arith.divf %110, %111 : vector<16x1xf32>
    %113 = arith.mulf %108, %108 : vector<16x32xf32>
    %cst_45 = arith.constant dense<0.000000e+00> : vector<16xf32>
    %114 = vector.multi_reduction <add>, %113, %cst_45 [1] : vector<16x32xf32> to vector<16xf32>
    %115 = vector.shape_cast %114 : vector<16xf32> to vector<16x1xf32>
    %cst_46 = arith.constant 3.200000e+01 : f32
    %116 = vector.broadcast %cst_46 : f32 to vector<16x1xf32>
    %117 = arith.divf %115, %116 : vector<16x1xf32>
    %118 = arith.mulf %112, %112 : vector<16x1xf32>
    %119 = arith.subf %117, %118 : vector<16x1xf32>
    %120 = vector.broadcast %112 : vector<16x1xf32> to vector<16x32xf32>
    %121 = arith.subf %108, %120 : vector<16x32xf32>
    %cst_47 = arith.constant 9.99999974E-6 : f32
    %122 = vector.broadcast %cst_47 : f32 to vector<16x1xf32>
    %123 = arith.addf %119, %122 : vector<16x1xf32>
    %124 = math.rsqrt %123 : vector<16x1xf32>
    %125 = vector.broadcast %124 : vector<16x1xf32> to vector<16x32xf32>
    %126 = arith.mulf %121, %125 : vector<16x32xf32>
    %c12 = arith.constant 12 : index
    %c0_48 = arith.constant 0 : index
    %127 = vector.load %arg2[%c12, %c0_48] : memref<16x128xf32, #tpu.memory_space<vmem>>, vector<1x32xf32>
    %128 = vector.broadcast %127 : vector<1x32xf32> to vector<16x32xf32>
    %129 = arith.mulf %126, %128 : vector<16x32xf32>
    %c13 = arith.constant 13 : index
    %c0_49 = arith.constant 0 : index
    %130 = vector.load %arg2[%c13, %c0_49] : memref<16x128xf32, #tpu.memory_space<vmem>>, vector<1x32xf32>
    %131 = vector.broadcast %130 : vector<1x32xf32> to vector<16x32xf32>
    %132 = arith.addf %129, %131 : vector<16x32xf32>
    %c240 = arith.constant 240 : index
    %c0_50 = arith.constant 0 : index
    %133 = vector.load %arg1[%c240, %c0_50] : memref<336x128xf32, #tpu.memory_space<vmem>>, vector<32x64xf32>
    %cst_51 = arith.constant dense<0.000000e+00> : vector<16x64xf32>
    %134 = tpu.matmul %132, %133, %cst_51 {dimension_numbers = #tpu.dot_dimension_numbers<[1], [0], [0], [1], [0, 0, 1, 1], [], []>} : vector<16x32xf32>, vector<32x64xf32>, vector<16x64xf32> -> vector<16x64xf32>
    %c14 = arith.constant 14 : index
    %c0_52 = arith.constant 0 : index
    %135 = vector.load %arg2[%c14, %c0_52] : memref<16x128xf32, #tpu.memory_space<vmem>>, vector<1x64xf32>
    %136 = vector.broadcast %135 : vector<1x64xf32> to vector<16x64xf32>
    %137 = arith.addf %134, %136 : vector<16x64xf32>
    %cst_53 = arith.constant 0.000000e+00 : f32
    %138 = vector.broadcast %cst_53 : f32 to vector<16x64xf32>
    %139 = arith.maximumf %137, %138 : vector<16x64xf32>
    %c272 = arith.constant 272 : index
    %c0_54 = arith.constant 0 : index
    %140 = vector.load %arg1[%c272, %c0_54] : memref<336x128xf32, #tpu.memory_space<vmem>>, vector<64x128xf32>
    %cst_55 = arith.constant dense<0.000000e+00> : vector<16x128xf32>
    %141 = tpu.matmul %139, %140, %cst_55 {dimension_numbers = #tpu.dot_dimension_numbers<[1], [0], [0], [1], [0, 0, 1, 1], [], []>} : vector<16x64xf32>, vector<64x128xf32>, vector<16x128xf32> -> vector<16x128xf32>
    %c15 = arith.constant 15 : index
    %c0_56 = arith.constant 0 : index
    %142 = vector.load %arg2[%c15, %c0_56] : memref<16x128xf32, #tpu.memory_space<vmem>>, vector<1x128xf32>
    %143 = vector.broadcast %142 : vector<1x128xf32> to vector<16x128xf32>
    %144 = arith.addf %141, %143 : vector<16x128xf32>
    %c0_57 = arith.constant 0 : index
    %c0_58 = arith.constant 0 : index
    %145 = vector.load %arg3[%c0_57, %c0_58] : memref<16x128xf32, #tpu.memory_space<vmem>>, vector<16x128xf32>
    tpu.vector_store %arg3[%c0_57, %c0_58], %144 {strides = array<i32>} : memref<16x128xf32, #tpu.memory_space<vmem>>, vector<16x128xf32>,
    return
  }
}

</mosaic_0001>

<llo_original>
// kernel: tpu_custom_call.1
$region0: #{tpu_custom_call.1}
  #allocation0 [shape = 'u32[]', space=smem, size = 0x4, offset = 0x4, fixed_abs, tag = 'smem constant byte address 0x4 - core index']
  #allocation1 [shape = 'u32[144,128]{1,0:T(1,128)}', space=vmem, size = 0x12000, scoped, tag = 'internal scratch']
  %s0 = inlined_call_operand.hbm [shape: f32[16,16], index: 0, kind: input, shape index: {}]
  %s1 = inlined_call_operand.hbm [shape: f32[336,128], index: 1, kind: input, shape index: {}]
  %s2 = inlined_call_operand.hbm [shape: f32[16,128], index: 2, kind: input, shape index: {}]
  %s3 = inlined_call_operand.hbm [shape: f32[16,128], index: 3, kind: output, shape index: {}]
  %s4 = sld [smem:[#allocation0]]
  $region34: #{tpu_custom_call.1} parent=0
    _
  %s6 = ssub.s32 1, %s4
  %s7 = scalar_select 0, %s6, %s4
  $region1: #{tpu_custom_call.1} parent=0
    #allocation2 [shape = 'u8[8192]{0}', space=vmem, size = 0x2000, scoped, tag = 'input window, operand 0, single buffered']
    #allocation3 [shape = 's32[1]{0}', space=sflag, size = 0x4, scoped, tag = 'scoped memory for tpu_custom_call.1']
    #allocation4 [shape = 's32[1]{0}', space=sflag, size = 0x4, scoped, tag = 'scoped memory for tpu_custom_call.1']
    #allocation5 [shape = 'u8[172032]{0}', space=vmem, size = 0x2a000, scoped, tag = 'input window, operand 1, single buffered']
    #allocation6 [shape = 's32[1]{0}', space=sflag, size = 0x4, scoped, tag = 'scoped memory for tpu_custom_call.1']
    #allocation7 [shape = 'u8[8192]{0}', space=vmem, size = 0x2000, scoped, tag = 'input window, operand 2, single buffered']
    #allocation8 [shape = 'u8[8192]{0}', space=vmem, size = 0x2000, scoped, tag = 'output window, operand 0, single buffered']
    %8 = vsyncpa [#allocation3], 0
    %9 = vsyncpa [#allocation6], 0
    %10 = vsyncpa [#allocation4], 0
    // Predicated region
    $region2: #{tpu_custom_call.1} parent=1 // pred_check
      _
    $region3: #{tpu_custom_call.1} parent=1 // pred_check_branch
      %12 = sbr.rel (0) target = $region5
    $region4: #{tpu_custom_call.1} parent=1 // pred_region
      %s14 = ssub.s32 256, 256
      %15 = vsyncadd [#allocation3], %s14
      %s16 = sshll.u32 [#allocation2], 4
      %s17 = int_to_ptr.vmem [resolvable:$true] %s16
      %22 = dma.hbm_to_vmem [thread:$0]  %s0, 256, %s17, [#allocation3], 128, 128, 8
    $region5: #{tpu_custom_call.1} parent=1 // pred_fallthru
      _
    // Predicated region
    $region6: #{tpu_custom_call.1} parent=1 // pred_check
      _
    $region7: #{tpu_custom_call.1} parent=1 // pred_check_branch
      %24 = sbr.rel (0) target = $region9
    $region8: #{tpu_custom_call.1} parent=1 // pred_region
      %s26 = ssub.s32 5376, 5376
      %27 = vsyncadd [#allocation6], %s26
      %s28 = sshll.u32 [#allocation5], 4
      %s29 = int_to_ptr.vmem [resolvable:$true] %s28
      %34 = dma.hbm_to_vmem [thread:$0]  %s1, 5376, %s29, [#allocation6], 128, 128, 8
    $region9: #{tpu_custom_call.1} parent=1 // pred_fallthru
      _
    // Predicated region
    $region10: #{tpu_custom_call.1} parent=1 // pred_check
      _
    $region11: #{tpu_custom_call.1} parent=1 // pred_check_branch
      %36 = sbr.rel (0) target = $region13
    $region12: #{tpu_custom_call.1} parent=1 // pred_region
      %s38 = ssub.s32 256, 256
      %39 = vsyncadd [#allocation6], %s38
      %s40 = sshll.u32 [#allocation7], 4
      %s41 = int_to_ptr.vmem [resolvable:$true] %s40
      %46 = dma.hbm_to_vmem [thread:$0]  %s2, 256, %s41, [#allocation6], 128, 128, 8
    $region13: #{tpu_custom_call.1} parent=1 // pred_fallthru
      _
    // Predicated region
    $region14: #{tpu_custom_call.1} parent=1 // pred_check
      _
    $region15: #{tpu_custom_call.1} parent=1 // pred_check_branch
      %48 = sbr.rel (0) target = $region17
    $region16: #{tpu_custom_call.1} parent=1 // pred_region
      %49 = dma.done [#allocation3], 256
    $region17: #{tpu_custom_call.1} parent=1 // pred_fallthru
      _
    // Predicated region
    $region18: #{tpu_custom_call.1} parent=1 // pred_check
      _
    $region19: #{tpu_custom_call.1} parent=1 // pred_check_branch
      %51 = sbr.rel (0) target = $region21
    $region20: #{tpu_custom_call.1} parent=1 // pred_region
      %52 = dma.done [#allocation6], 5376
    $region21: #{tpu_custom_call.1} parent=1 // pred_fallthru
      _
    // Predicated region
    $region22: #{tpu_custom_call.1} parent=1 // pred_check
      _
    $region23: #{tpu_custom_call.1} parent=1 // pred_check_branch
      %54 = sbr.rel (0) target = $region25
    $region24: #{tpu_custom_call.1} parent=1 // pred_region
      %55 = dma.done [#allocation6], 256
    $region25: #{tpu_custom_call.1} parent=1 // pred_fallthru
      _
    %v56 = vld [vmem:[#allocation2] sm:$0xff]
    %v57 = vld [vmem:[#allocation2 + $0x8] sm:$0xff]
    %v58 = vld [vmem:[#allocation5] sm:$0xff]
    %v59 = vld [vmem:[#allocation5 + $0x8] sm:$0xff]
    %v60 = vld [vmem:[#allocation7] sm:$0x1]
    %v61 = vlaneseq
    %v62 = vshrl.u32 %v61, 7
    %v63 = vsub.s32 0, %v62
    %v64 = vrot.slane %v60, %v63
    %vm65 = vcmask 130048
    %v67 = vsel %vm65, %v56, 0
    %v70 = vsel %vm65, %v57, 0
    %72 = vmatprep.subr.mxu0 0.0
    %73 = vmatpush1.msra.mxu0 %v58
    %74 = vmatprep.subr.mxu0 0.0
    %75 = vmatpush1.msra.mxu0 %v59
    %76 = vmatprep.subr.mxu0 0.0
    %77 = vmatpush1.msra.mxu0 0.0
    %78 = vmatprep.subr.mxu0 0.0
    %79 = vmatpush1.msra.mxu0 0.0
    %80 = vmatprep.subr.mxu0 0.0
    %81 = vmatpush1.msra.mxu0 0.0
    %82 = vmatprep.subr.mxu0 0.0
    %83 = vmatpush1.msra.mxu0 0.0
    %84 = vmatprep.subr.mxu0 0.0
    %85 = vmatpush1.msra.mxu0 0.0
    %86 = vmatprep.subr.mxu0 0.0
    %87 = vmatpush1.msra.mxu0 0.0
    %88 = vmatprep.subr.mxu0 0.0
    %89 = vmatpush1.msra.mxu0 0.0
    %90 = vmatprep.subr.mxu0 0.0
    %91 = vmatpush1.msra.mxu0 0.0
    %92 = vmatprep.subr.mxu0 0.0
    %93 = vmatpush1.msra.mxu0 0.0
    %94 = vmatprep.subr.mxu0 0.0
    %95 = vmatpush1.msra.mxu0 0.0
    %96 = vmatprep.subr.mxu0 0.0
    %97 = vmatpush1.msra.mxu0 0.0
    %98 = vmatprep.subr.mxu0 0.0
    %99 = vmatpush1.msra.mxu0 0.0
    %100 = vmatprep.subr.mxu0 0.0
    %101 = vmatpush1.msra.mxu0 0.0
    %102 = vmatprep.subr.mxu0 0.0
    %103 = vmatpush1.msra.mxu0 0.0
    %104 = vmatprep.subr.mxu0 0.0
    %105 = vmatpush1.msra.mxu0 0.0
    %106 = vmatprep.subr.mxu0 0.0
    %107 = vmatpush1.msra.mxu0 0.0
    %108 = vmatprep.subr.mxu0 0.0
    %109 = vmatpush1.msra.mxu0 0.0
    %110 = vmatprep.subr.mxu0 0.0
    %111 = vmatpush1.msra.mxu0 0.0
    %112 = vmatprep.subr.mxu0 0.0
    %113 = vmatpush1.msra.mxu0 0.0
    %114 = vmatprep.subr.mxu0 0.0
    %115 = vmatpush1.msra.mxu0 0.0
    %116 = vmatprep.subr.mxu0 0.0
    %117 = vmatpush1.msra.mxu0 0.0
    %118 = vmatprep.subr.mxu0 0.0
    %119 = vmatpush1.msra.mxu0 0.0
    %120 = vmatprep.subr.mxu0 0.0
    %121 = vmatpush1.msra.mxu0 0.0
    %122 = vmatprep.subr.mxu0 0.0
    %123 = vmatpush1.msra.mxu0 0.0
    %124 = vmatprep.subr.mxu0 0.0
    %125 = vmatpush1.msra.mxu0 0.0
    %126 = vmatprep.subr.mxu0 0.0
    %127 = vmatpush1.msra.mxu0 0.0
    %128 = vmatprep.subr.mxu0 0.0
    %129 = vmatpush1.msra.mxu0 0.0
    %130 = vmatprep.subr.mxu0 0.0
    %131 = vmatpush1.msra.mxu0 0.0
    %132 = vmatprep.subr.mxu0 0.0
    %133 = vmatpush1.msra.mxu0 0.0
    %134 = vmatprep.subr.mxu0 0.0
    %135 = vmatpush1.msra.mxu0 0.0
    %136 = vmatprep.mubr.f32.mxu0 0.0
    %137 = vmatmul.mubr.f32.gmra.mrb[0].mxu0 %v67
    %v138 = vpop.f32.mrb[0].mxu0
    %v139 = vadd.f32 %v64, %v138
    %v140 = vpop.f32.mrb[0].mxu0
    %141 = vmatprep.mubr.f32.mxu0 0.0
    %142 = vmatmul.mubr.f32.gmra.mrb[0].mxu0 %v70
    %v143 = vpop.f32.mrb[0].mxu0
    %v144 = vadd.f32 %v64, %v143
    %v145 = vpop.f32.mrb[0].mxu0
    %146 = vdwg.mxu0
    %vm147 = vcmask 261120
    %v148 = vsel %vm147, %v139, 0.0
    %149 = vadd.xlane.f32.xlu0 %v148
    %v150 = vpop.xlane.xlu0 %149
    %v151 = vsel %vm147, %v144, 0.0
    %152 = vadd.xlane.f32.xlu0 %v151
    %v153 = vpop.xlane.xlu0 %152
    %v154 = vrcp.pop 32.0
    %v155 = vmul.f32 %v150, %v154
    %v156 = vmul.f32 %v153, %v154
    %v157 = vmul.f32 %v139, %v139
    %v158 = vmul.f32 %v144, %v144
    %v159 = vsel %vm147, %v157, 0.0
    %160 = vadd.xlane.f32.xlu0 %v159
    %v161 = vpop.xlane.xlu0 %160
    %v162 = vsel %vm147, %v158, 0.0
    %163 = vadd.xlane.f32.xlu0 %v162
    %v164 = vpop.xlane.xlu0 %163
    %v165 = vmul.f32 %v161, %v154
    %v166 = vmul.f32 %v164, %v154
    %v167 = vmul.f32 %v155, %v155
    %v168 = vmul.f32 %v156, %v156
    %v169 = vsub.f32 %v165, %v167
    %v170 = vsub.f32 %v166, %v168
    %v171 = vsub.f32 %v139, %v155
    %v172 = vsub.f32 %v144, %v156
    %v173 = vadd.f32 %v169, 1e-05
    %v174 = vadd.f32 %v170, 1e-05
    %v175 = vrsqrt.pop %v173
    %v176 = vrsqrt.pop %v174
    %v177 = vmul.f32 %v171, %v175
    %v178 = vmul.f32 %v172, %v176
    %v179 = vld [vmem:[#allocation7 + $0x2] sm:$0x1]
    %v180 = vlaneseq
    %v181 = vshrl.u32 %v180, 7
    %v182 = vsub.s32 0, %v181
    %v183 = vrot.slane %v179, %v182
    %v184 = vmul.f32 %v177, %v183
    %v185 = vmul.f32 %v178, %v183
    %v186 = vld [vmem:[#allocation7 + $0x3] sm:$0x1]
    %v187 = vlaneseq
    %v188 = vshrl.u32 %v187, 7
    %v189 = vsub.s32 0, %v188
    %v190 = vrot.slane %v186, %v189
    %v191 = vadd.f32 %v184, %v190
    %v192 = vadd.f32 %v185, %v190
    %v193 = vld [vmem:[#allocation5 + $0x30] sm:$0xff]
    %v194 = vld [vmem:[#allocation5 + $0x38] sm:$0xff]
    %v195 = vld [vmem:[#allocation5 + $0x40] sm:$0xff]
    %v196 = vld [vmem:[#allocation5 + $0x48] sm:$0xff]
    %v197 = vld [vmem:[#allocation7 + $0x4] sm:$0x1]
    %v198 = vlaneseq
    %v199 = vshrl.u32 %v198, 7
    %v200 = vsub.s32 0, %v199
    %v201 = vrot.slane %v197, %v200
    %v203 = vsel %vm147, %v191, 0
    %v206 = vsel %vm147, %v192, 0
    %208 = vmatprep.subr.mxu0 0.0
    %209 = vmatpush1.msra.mxu0 %v193
    %210 = vmatprep.subr.mxu0 0.0
    %211 = vmatpush1.msra.mxu0 %v194
    %212 = vmatprep.subr.mxu0 0.0
    %213 = vmatpush1.msra.mxu0 %v195
    %214 = vmatprep.subr.mxu0 0.0
    %215 = vmatpush1.msra.mxu0 %v196
    %216 = vmatprep.subr.mxu0 0.0
    %217 = vmatpush1.msra.mxu0 0.0
    %218 = vmatprep.subr.mxu0 0.0
    %219 = vmatpush1.msra.mxu0 0.0
    %220 = vmatprep.subr.mxu0 0.0
    %221 = vmatpush1.msra.mxu0 0.0
    %222 = vmatprep.subr.mxu0 0.0
    %223 = vmatpush1.msra.mxu0 0.0
    %224 = vmatprep.subr.mxu0 0.0
    %225 = vmatpush1.msra.mxu0 0.0
    %226 = vmatprep.subr.mxu0 0.0
    %227 = vmatpush1.msra.mxu0 0.0
    %228 = vmatprep.subr.mxu0 0.0
    %229 = vmatpush1.msra.mxu0 0.0
    %230 = vmatprep.subr.mxu0 0.0
    %231 = vmatpush1.msra.mxu0 0.0
    %232 = vmatprep.subr.mxu0 0.0
    %233 = vmatpush1.msra.mxu0 0.0
    %234 = vmatprep.subr.mxu0 0.0
    %235 = vmatpush1.msra.mxu0 0.0
    %236 = vmatprep.subr.mxu0 0.0
    %237 = vmatpush1.msra.mxu0 0.0
    %238 = vmatprep.subr.mxu0 0.0
    %239 = vmatpush1.msra.mxu0 0.0
    %240 = vmatprep.subr.mxu0 0.0
    %241 = vmatpush1.msra.mxu0 0.0
    %242 = vmatprep.subr.mxu0 0.0
    %243 = vmatpush1.msra.mxu0 0.0
    %244 = vmatprep.subr.mxu0 0.0
    %245 = vmatpush1.msra.mxu0 0.0
    %246 = vmatprep.subr.mxu0 0.0
    %247 = vmatpush1.msra.mxu0 0.0
    %248 = vmatprep.subr.mxu0 0.0
    %249 = vmatpush1.msra.mxu0 0.0
    %250 = vmatprep.subr.mxu0 0.0
    %251 = vmatpush1.msra.mxu0 0.0
    %252 = vmatprep.subr.mxu0 0.0
    %253 = vmatpush1.msra.mxu0 0.0
    %254 = vmatprep.subr.mxu0 0.0
    %255 = vmatpush1.msra.mxu0 0.0
    %256 = vmatprep.subr.mxu0 0.0
    %257 = vmatpush1.msra.mxu0 0.0
    %258 = vmatprep.subr.mxu0 0.0
    %259 = vmatpush1.msra.mxu0 0.0
    %260 = vmatprep.subr.mxu0 0.0
    %261 = vmatpush1.msra.mxu0 0.0
    %262 = vmatprep.subr.mxu0 0.0
    %263 = vmatpush1.msra.mxu0 0.0
    %264 = vmatprep.subr.mxu0 0.0
    %265 = vmatpush1.msra.mxu0 0.0
    %266 = vmatprep.subr.mxu0 0.0
    %267 = vmatpush1.msra.mxu0 0.0
    %268 = vmatprep.subr.mxu0 0.0
    %269 = vmatpush1.msra.mxu0 0.0
    %270 = vmatprep.subr.mxu0 0.0
    %271 = vmatpush1.msra.mxu0 0.0
    %272 = vmatprep.mubr.f32.mxu0 0.0
    %273 = vmatmul.mubr.f32.gmra.mrb[0].mxu0 %v203
    %v274 = vpop.f32.mrb[0].mxu0
    %v275 = vadd.f32 %v201, %v274
    %v276 = vpop.f32.mrb[0].mxu0
    %277 = vmatprep.mubr.f32.mxu0 0.0
    %278 = vmatmul.mubr.f32.gmra.mrb[0].mxu0 %v206
    %v279 = vpop.f32.mrb[0].mxu0
    %v280 = vadd.f32 %v201, %v279
    %v281 = vpop.f32.mrb[0].mxu0
    %282 = vdwg.mxu0
    %v283 = vmax.f32 %v275, 0.0
    %v284 = vmax.f32 %v280, 0.0
    %v285 = vld [vmem:[#allocation5 + $0x50] sm:$0xff]
    %v286 = vld [vmem:[#allocation5 + $0x58] sm:$0xff]
    %v287 = vld [vmem:[#allocation5 + $0x60] sm:$0xff]
    %v288 = vld [vmem:[#allocation5 + $0x68] sm:$0xff]
    %v289 = vld [vmem:[#allocation5 + $0x70] sm:$0xff]
    %v290 = vld [vmem:[#allocation5 + $0x78] sm:$0xff]
    %v291 = vld [vmem:[#allocation5 + $0x80] sm:$0xff]
    %v292 = vld [vmem:[#allocation5 + $0x88] sm:$0xff]
    %v293 = vld [vmem:[#allocation7 + $0x5] sm:$0x1]
    %v294 = vlaneseq
    %v295 = vshrl.u32 %v294, 7
    %v296 = vsub.s32 0, %v295
    %v297 = vrot.slane %v293, %v296
    %vm298 = vcmask 523264
    %v300 = vsel %vm298, %v283, 0
    %v303 = vsel %vm298, %v284, 0
    %305 = vmatprep.subr.mxu0 0.0
    %306 = vmatpush1.msra.mxu0 %v285
    %307 = vmatprep.subr.mxu0 0.0
    %308 = vmatpush1.msra.mxu0 %v286
    %309 = vmatprep.subr.mxu0 0.0
    %310 = vmatpush1.msra.mxu0 %v287
    %311 = vmatprep.subr.mxu0 0.0
    %312 = vmatpush1.msra.mxu0 %v288
    %313 = vmatprep.subr.mxu0 0.0
    %314 = vmatpush1.msra.mxu0 %v289
    %315 = vmatprep.subr.mxu0 0.0
    %316 = vmatpush1.msra.mxu0 %v290
    %317 = vmatprep.subr.mxu0 0.0
    %318 = vmatpush1.msra.mxu0 %v291
    %319 = vmatprep.subr.mxu0 0.0
    %320 = vmatpush1.msra.mxu0 %v292
    %321 = vmatprep.subr.mxu0 0.0
    %322 = vmatpush1.msra.mxu0 0.0
    %323 = vmatprep.subr.mxu0 0.0
    %324 = vmatpush1.msra.mxu0 0.0
    %325 = vmatprep.subr.mxu0 0.0
    %326 = vmatpush1.msra.mxu0 0.0
    %327 = vmatprep.subr.mxu0 0.0
    %328 = vmatpush1.msra.mxu0 0.0
    %329 = vmatprep.subr.mxu0 0.0
    %330 = vmatpush1.msra.mxu0 0.0
    %331 = vmatprep.subr.mxu0 0.0
    %332 = vmatpush1.msra.mxu0 0.0
    %333 = vmatprep.subr.mxu0 0.0
    %334 = vmatpush1.msra.mxu0 0.0
    %335 = vmatprep.subr.mxu0 0.0
    %336 = vmatpush1.msra.mxu0 0.0
    %337 = vmatprep.subr.mxu0 0.0
    %338 = vmatpush1.msra.mxu0 0.0
    %339 = vmatprep.subr.mxu0 0.0
    %340 = vmatpush1.msra.mxu0 0.0
    %341 = vmatprep.subr.mxu0 0.0
    %342 = vmatpush1.msra.mxu0 0.0
    %343 = vmatprep.subr.mxu0 0.0
    %344 = vmatpush1.msra.mxu0 0.0
    %345 = vmatprep.subr.mxu0 0.0
    %346 = vmatpush1.msra.mxu0 0.0
    %347 = vmatprep.subr.mxu0 0.0
    %348 = vmatpush1.msra.mxu0 0.0
    %349 = vmatprep.subr.mxu0 0.0
    %350 = vmatpush1.msra.mxu0 0.0
    %351 = vmatprep.subr.mxu0 0.0
    %352 = vmatpush1.msra.mxu0 0.0
    %353 = vmatprep.subr.mxu0 0.0
    %354 = vmatpush1.msra.mxu0 0.0
    %355 = vmatprep.subr.mxu0 0.0
    %356 = vmatpush1.msra.mxu0 0.0
    %357 = vmatprep.subr.mxu0 0.0
    %358 = vmatpush1.msra.mxu0 0.0
    %359 = vmatprep.subr.mxu0 0.0
    %360 = vmatpush1.msra.mxu0 0.0
    %361 = vmatprep.subr.mxu0 0.0
    %362 = vmatpush1.msra.mxu0 0.0
    %363 = vmatprep.subr.mxu0 0.0
    %364 = vmatpush1.msra.mxu0 0.0
    %365 = vmatprep.subr.mxu0 0.0
    %366 = vmatpush1.msra.mxu0 0.0
    %367 = vmatprep.subr.mxu0 0.0
    %368 = vmatpush1.msra.mxu0 0.0
    %369 = vmatprep.mubr.f32.mxu0 0.0
    %370 = vmatmul.mubr.f32.gmra.mrb[0].mxu0 %v300
    %v371 = vpop.f32.mrb[0].mxu0
    %v372 = vadd.f32 %v297, %v371
    %v373 = vpop.f32.mrb[0].mxu0
    %374 = vmatprep.mubr.f32.mxu0 0.0
    %375 = vmatmul.mubr.f32.gmra.mrb[0].mxu0 %v303
    %v376 = vpop.f32.mrb[0].mxu0
    %v377 = vadd.f32 %v297, %v376
    %v378 = vpop.f32.mrb[0].mxu0
    %379 = vdwg.mxu0
    %v380 = vadd.f32 %v191, %v372
    %v381 = vadd.f32 %v192, %v377
    %v382 = vsel %vm147, %v380, 0.0
    %383 = vadd.xlane.f32.xlu0 %v382
    %v384 = vpop.xlane.xlu0 %383
    %v385 = vsel %vm147, %v381, 0.0
    %386 = vadd.xlane.f32.xlu0 %v385
    %v387 = vpop.xlane.xlu0 %386
    %v388 = vmul.f32 %v384, %v154
    %v389 = vmul.f32 %v387, %v154
    %v390 = vmul.f32 %v380, %v380
    %v391 = vmul.f32 %v381, %v381
    %v392 = vsel %vm147, %v390, 0.0
    %393 = vadd.xlane.f32.xlu0 %v392
    %v394 = vpop.xlane.xlu0 %393
    %v395 = vsel %vm147, %v391, 0.0
    %396 = vadd.xlane.f32.xlu0 %v395
    %v397 = vpop.xlane.xlu0 %396
    %v398 = vmul.f32 %v394, %v154
    %v399 = vmul.f32 %v397, %v154
    %v400 = vmul.f32 %v388, %v388
    %v401 = vmul.f32 %v389, %v389
    %v402 = vsub.f32 %v398, %v400
    %v403 = vsub.f32 %v399, %v401
    %v404 = vsub.f32 %v380, %v388
    %v405 = vsub.f32 %v381, %v389
    %v406 = vadd.f32 %v402, 1e-05
    %v407 = vadd.f32 %v403, 1e-05
    %v408 = vrsqrt.pop %v406
    %v409 = vrsqrt.pop %v407
    %v410 = vmul.f32 %v404, %v408
    %v411 = vmul.f32 %v405, %v409
    %v412 = vld [vmem:[#allocation7 + $0x6] sm:$0x1]
    %v413 = vlaneseq
    %v414 = vshrl.u32 %v413, 7
    %v415 = vsub.s32 0, %v414
    %v416 = vrot.slane %v412, %v415
    %v417 = vmul.f32 %v410, %v416
    %v418 = vmul.f32 %v411, %v416
    %v419 = vld [vmem:[#allocation7 + $0x7] sm:$0x1]
    %v420 = vlaneseq
    %v421 = vshrl.u32 %v420, 7
    %v422 = vsub.s32 0, %v421
    %v423 = vrot.slane %v419, %v422
    %v424 = vadd.f32 %v417, %v423
    %v425 = vadd.f32 %v418, %v423
    %v426 = vld [vmem:[#allocation5 + $0x10] sm:$0xff]
    %v427 = vld [vmem:[#allocation5 + $0x18] sm:$0xff]
    %v428 = vld [vmem:[#allocation5 + $0x20] sm:$0xff]
    %v429 = vld [vmem:[#allocation5 + $0x28] sm:$0xff]
    %v430 = vld [vmem:[#allocation7 + $0x1] sm:$0x1]
    %v431 = vlaneseq
    %v432 = vshrl.u32 %v431, 7
    %v433 = vsub.s32 0, %v432
    %v434 = vrot.slane %v430, %v433
    %v436 = vsel %vm147, %v424, 0
    %v439 = vsel %vm147, %v425, 0
    %441 = vmatprep.subr.mxu0 0.0
    %442 = vmatpush1.msra.mxu0 %v426
    %443 = vmatprep.subr.mxu0 0.0
    %444 = vmatpush1.msra.mxu0 %v427
    %445 = vmatprep.subr.mxu0 0.0
    %446 = vmatpush1.msra.mxu0 %v428
    %447 = vmatprep.subr.mxu0 0.0
    %448 = vmatpush1.msra.mxu0 %v429
    %449 = vmatprep.subr.mxu0 0.0
    %450 = vmatpush1.msra.mxu0 0.0
    %451 = vmatprep.subr.mxu0 0.0
    %452 = vmatpush1.msra.mxu0 0.0
    %453 = vmatprep.subr.mxu0 0.0
    %454 = vmatpush1.msra.mxu0 0.0
    %455 = vmatprep.subr.mxu0 0.0
    %456 = vmatpush1.msra.mxu0 0.0
    %457 = vmatprep.subr.mxu0 0.0
    %458 = vmatpush1.msra.mxu0 0.0
    %459 = vmatprep.subr.mxu0 0.0
    %460 = vmatpush1.msra.mxu0 0.0
    %461 = vmatprep.subr.mxu0 0.0
    %462 = vmatpush1.msra.mxu0 0.0
    %463 = vmatprep.subr.mxu0 0.0
    %464 = vmatpush1.msra.mxu0 0.0
    %465 = vmatprep.subr.mxu0 0.0
    %466 = vmatpush1.msra.mxu0 0.0
    %467 = vmatprep.subr.mxu0 0.0
    %468 = vmatpush1.msra.mxu0 0.0
    %469 = vmatprep.subr.mxu0 0.0
    %470 = vmatpush1.msra.mxu0 0.0
    %471 = vmatprep.subr.mxu0 0.0
    %472 = vmatpush1.msra.mxu0 0.0
    %473 = vmatprep.subr.mxu0 0.0
    %474 = vmatpush1.msra.mxu0 0.0
    %475 = vmatprep.subr.mxu0 0.0
    %476 = vmatpush1.msra.mxu0 0.0
    %477 = vmatprep.subr.mxu0 0.0
    %478 = vmatpush1.msra.mxu0 0.0
    %479 = vmatprep.subr.mxu0 0.0
    %480 = vmatpush1.msra.mxu0 0.0
    %481 = vmatprep.subr.mxu0 0.0
    %482 = vmatpush1.msra.mxu0 0.0
    %483 = vmatprep.subr.mxu0 0.0
    %484 = vmatpush1.msra.mxu0 0.0
    %485 = vmatprep.subr.mxu0 0.0
    %486 = vmatpush1.msra.mxu0 0.0
    %487 = vmatprep.subr.mxu0 0.0
    %488 = vmatpush1.msra.mxu0 0.0
    %489 = vmatprep.subr.mxu0 0.0
    %490 = vmatpush1.msra.mxu0 0.0
    %491 = vmatprep.subr.mxu0 0.0
    %492 = vmatpush1.msra.mxu0 0.0
    %493 = vmatprep.subr.mxu0 0.0
    %494 = vmatpush1.msra.mxu0 0.0
    %495 = vmatprep.subr.mxu0 0.0
    %496 = vmatpush1.msra.mxu0 0.0
    %497 = vmatprep.subr.mxu0 0.0
    %498 = vmatpush1.msra.mxu0 0.0
    %499 = vmatprep.subr.mxu0 0.0
    %500 = vmatpush1.msra.mxu0 0.0
    %501 = vmatprep.subr.mxu0 0.0
    %502 = vmatpush1.msra.mxu0 0.0
    %503 = vmatprep.subr.mxu0 0.0
    %504 = vmatpush1.msra.mxu0 0.0
    %505 = vmatprep.mubr.f32.mxu0 0.0
    %506 = vmatmul.mubr.f32.gmra.mrb[0].mxu0 %v436
    %v507 = vpop.f32.mrb[0].mxu0
    %v508 = vadd.f32 %v434, %v507
    %v509 = vpop.f32.mrb[0].mxu0
    %510 = vmatprep.mubr.f32.mxu0 0.0
    %511 = vmatmul.mubr.f32.gmra.mrb[0].mxu0 %v439
    %v512 = vpop.f32.mrb[0].mxu0
    %v513 = vadd.f32 %v434, %v512
    %v514 = vpop.f32.mrb[0].mxu0
    %515 = vdwg.mxu0
    %v516 = vsel %vm147, %v508, 0.0
    %517 = vadd.xlane.f32.xlu0 %v516
    %v518 = vpop.xlane.xlu0 %517
    %v519 = vsel %vm147, %v513, 0.0
    %520 = vadd.xlane.f32.xlu0 %v519
    %v521 = vpop.xlane.xlu0 %520
    %v522 = vmul.f32 %v518, %v154
    %v523 = vmul.f32 %v521, %v154
    %v524 = vmul.f32 %v508, %v508
    %v525 = vmul.f32 %v513, %v513
    %v526 = vsel %vm147, %v524, 0.0
    %527 = vadd.xlane.f32.xlu0 %v526
    %v528 = vpop.xlane.xlu0 %527
    %v529 = vsel %vm147, %v525, 0.0
    %530 = vadd.xlane.f32.xlu0 %v529
    %v531 = vpop.xlane.xlu0 %530
    %v532 = vmul.f32 %v528, %v154
    %v533 = vmul.f32 %v531, %v154
    %v534 = vmul.f32 %v522, %v522
    %v535 = vmul.f32 %v523, %v523
    %v536 = vsub.f32 %v532, %v534
    %v537 = vsub.f32 %v533, %v535
    %v538 = vsub.f32 %v508, %v522
    %v539 = vsub.f32 %v513, %v523
    %v540 = vadd.f32 %v536, 1e-05
    %v541 = vadd.f32 %v537, 1e-05
    %v542 = vrsqrt.pop %v540
    %v543 = vrsqrt.pop %v541
    %v544 = vmul.f32 %v538, %v542
    %v545 = vmul.f32 %v539, %v543
    %v546 = vld [vmem:[#allocation7 + $0x8] sm:$0x1]
    %v547 = vlaneseq
    %v548 = vshrl.u32 %v547, 7
    %v549 = vsub.s32 0, %v548
    %v550 = vrot.slane %v546, %v549
    %v551 = vmul.f32 %v544, %v550
    %v552 = vmul.f32 %v545, %v550
    %v553 = vld [vmem:[#allocation7 + $0x9] sm:$0x1]
    %v554 = vlaneseq
    %v555 = vshrl.u32 %v554, 7
    %v556 = vsub.s32 0, %v555
    %v557 = vrot.slane %v553, %v556
    %v558 = vadd.f32 %v551, %v557
    %v559 = vadd.f32 %v552, %v557
    %v560 = vld [vmem:[#allocation5 + $0x90] sm:$0xff]
    %v561 = vld [vmem:[#allocation5 + $0x98] sm:$0xff]
    %v562 = vld [vmem:[#allocation5 + $0xa0] sm:$0xff]
    %v563 = vld [vmem:[#allocation5 + $0xa8] sm:$0xff]
    %v564 = vld [vmem:[#allocation7 + $0xa] sm:$0x1]
    %v565 = vlaneseq
    %v566 = vshrl.u32 %v565, 7
    %v567 = vsub.s32 0, %v566
    %v568 = vrot.slane %v564, %v567
    %v570 = vsel %vm147, %v558, 0
    %v573 = vsel %vm147, %v559, 0
    %575 = vmatprep.subr.mxu0 0.0
    %576 = vmatpush1.msra.mxu0 %v560
    %577 = vmatprep.subr.mxu0 0.0
    %578 = vmatpush1.msra.mxu0 %v561
    %579 = vmatprep.subr.mxu0 0.0
    %580 = vmatpush1.msra.mxu0 %v562
    %581 = vmatprep.subr.mxu0 0.0
    %582 = vmatpush1.msra.mxu0 %v563
    %583 = vmatprep.subr.mxu0 0.0
    %584 = vmatpush1.msra.mxu0 0.0
    %585 = vmatprep.subr.mxu0 0.0
    %586 = vmatpush1.msra.mxu0 0.0
    %587 = vmatprep.subr.mxu0 0.0
    %588 = vmatpush1.msra.mxu0 0.0
    %589 = vmatprep.subr.mxu0 0.0
    %590 = vmatpush1.msra.mxu0 0.0
    %591 = vmatprep.subr.mxu0 0.0
    %592 = vmatpush1.msra.mxu0 0.0
    %593 = vmatprep.subr.mxu0 0.0
    %594 = vmatpush1.msra.mxu0 0.0
    %595 = vmatprep.subr.mxu0 0.0
    %596 = vmatpush1.msra.mxu0 0.0
    %597 = vmatprep.subr.mxu0 0.0
    %598 = vmatpush1.msra.mxu0 0.0
    %599 = vmatprep.subr.mxu0 0.0
    %600 = vmatpush1.msra.mxu0 0.0
    %601 = vmatprep.subr.mxu0 0.0
    %602 = vmatpush1.msra.mxu0 0.0
    %603 = vmatprep.subr.mxu0 0.0
    %604 = vmatpush1.msra.mxu0 0.0
    %605 = vmatprep.subr.mxu0 0.0
    %606 = vmatpush1.msra.mxu0 0.0
    %607 = vmatprep.subr.mxu0 0.0
    %608 = vmatpush1.msra.mxu0 0.0
    %609 = vmatprep.subr.mxu0 0.0
    %610 = vmatpush1.msra.mxu0 0.0
    %611 = vmatprep.subr.mxu0 0.0
    %612 = vmatpush1.msra.mxu0 0.0
    %613 = vmatprep.subr.mxu0 0.0
    %614 = vmatpush1.msra.mxu0 0.0
    %615 = vmatprep.subr.mxu0 0.0
    %616 = vmatpush1.msra.mxu0 0.0
    %617 = vmatprep.subr.mxu0 0.0
    %618 = vmatpush1.msra.mxu0 0.0
    %619 = vmatprep.subr.mxu0 0.0
    %620 = vmatpush1.msra.mxu0 0.0
    %621 = vmatprep.subr.mxu0 0.0
    %622 = vmatpush1.msra.mxu0 0.0
    %623 = vmatprep.subr.mxu0 0.0
    %624 = vmatpush1.msra.mxu0 0.0
    %625 = vmatprep.subr.mxu0 0.0
    %626 = vmatpush1.msra.mxu0 0.0
    %627 = vmatprep.subr.mxu0 0.0
    %628 = vmatpush1.msra.mxu0 0.0
    %629 = vmatprep.subr.mxu0 0.0
    %630 = vmatpush1.msra.mxu0 0.0
    %631 = vmatprep.subr.mxu0 0.0
    %632 = vmatpush1.msra.mxu0 0.0
    %633 = vmatprep.subr.mxu0 0.0
    %634 = vmatpush1.msra.mxu0 0.0
    %635 = vmatprep.subr.mxu0 0.0
    %636 = vmatpush1.msra.mxu0 0.0
    %637 = vmatprep.subr.mxu0 0.0
    %638 = vmatpush1.msra.mxu0 0.0
    %639 = vmatprep.mubr.f32.mxu0 0.0
    %640 = vmatmul.mubr.f32.gmra.mrb[0].mxu0 %v570
    %v641 = vpop.f32.mrb[0].mxu0
    %v642 = vadd.f32 %v568, %v641
    %v643 = vpop.f32.mrb[0].mxu0
    %644 = vmatprep.mubr.f32.mxu0 0.0
    %645 = vmatmul.mubr.f32.gmra.mrb[0].mxu0 %v573
    %v646 = vpop.f32.mrb[0].mxu0
    %v647 = vadd.f32 %v568, %v646
    %v648 = vpop.f32.mrb[0].mxu0
    %649 = vdwg.mxu0
    %v650 = vmax.f32 %v642, 0.0
    %v651 = vmax.f32 %v647, 0.0
    %v652 = vld [vmem:[#allocation5 + $0xb0] sm:$0xff]
    %v653 = vld [vmem:[#allocation5 + $0xb8] sm:$0xff]
    %v654 = vld [vmem:[#allocation5 + $0xc0] sm:$0xff]
    %v655 = vld [vmem:[#allocation5 + $0xc8] sm:$0xff]
    %v656 = vld [vmem:[#allocation5 + $0xd0] sm:$0xff]
    %v657 = vld [vmem:[#allocation5 + $0xd8] sm:$0xff]
    %v658 = vld [vmem:[#allocation5 + $0xe0] sm:$0xff]
    %v659 = vld [vmem:[#allocation5 + $0xe8] sm:$0xff]
    %v660 = vld [vmem:[#allocation7 + $0xb] sm:$0x1]
    %v661 = vlaneseq
    %v662 = vshrl.u32 %v661, 7
    %v663 = vsub.s32 0, %v662
    %v664 = vrot.slane %v660, %v663
    %v666 = vsel %vm298, %v650, 0
    %v669 = vsel %vm298, %v651, 0
    %671 = vmatprep.subr.mxu0 0.0
    %672 = vmatpush1.msra.mxu0 %v652
    %673 = vmatprep.subr.mxu0 0.0
    %674 = vmatpush1.msra.mxu0 %v653
    %675 = vmatprep.subr.mxu0 0.0
    %676 = vmatpush1.msra.mxu0 %v654
    %677 = vmatprep.subr.mxu0 0.0
    %678 = vmatpush1.msra.mxu0 %v655
    %679 = vmatprep.subr.mxu0 0.0
    %680 = vmatpush1.msra.mxu0 %v656
    %681 = vmatprep.subr.mxu0 0.0
    %682 = vmatpush1.msra.mxu0 %v657
    %683 = vmatprep.subr.mxu0 0.0
    %684 = vmatpush1.msra.mxu0 %v658
    %685 = vmatprep.subr.mxu0 0.0
    %686 = vmatpush1.msra.mxu0 %v659
    %687 = vmatprep.subr.mxu0 0.0
    %688 = vmatpush1.msra.mxu0 0.0
    %689 = vmatprep.subr.mxu0 0.0
    %690 = vmatpush1.msra.mxu0 0.0
    %691 = vmatprep.subr.mxu0 0.0
    %692 = vmatpush1.msra.mxu0 0.0
    %693 = vmatprep.subr.mxu0 0.0
    %694 = vmatpush1.msra.mxu0 0.0
    %695 = vmatprep.subr.mxu0 0.0
    %696 = vmatpush1.msra.mxu0 0.0
    %697 = vmatprep.subr.mxu0 0.0
    %698 = vmatpush1.msra.mxu0 0.0
    %699 = vmatprep.subr.mxu0 0.0
    %700 = vmatpush1.msra.mxu0 0.0
    %701 = vmatprep.subr.mxu0 0.0
    %702 = vmatpush1.msra.mxu0 0.0
    %703 = vmatprep.subr.mxu0 0.0
    %704 = vmatpush1.msra.mxu0 0.0
    %705 = vmatprep.subr.mxu0 0.0
    %706 = vmatpush1.msra.mxu0 0.0
    %707 = vmatprep.subr.mxu0 0.0
    %708 = vmatpush1.msra.mxu0 0.0
    %709 = vmatprep.subr.mxu0 0.0
    %710 = vmatpush1.msra.mxu0 0.0
    %711 = vmatprep.subr.mxu0 0.0
    %712 = vmatpush1.msra.mxu0 0.0
    %713 = vmatprep.subr.mxu0 0.0
    %714 = vmatpush1.msra.mxu0 0.0
    %715 = vmatprep.subr.mxu0 0.0
    %716 = vmatpush1.msra.mxu0 0.0
    %717 = vmatprep.subr.mxu0 0.0
    %718 = vmatpush1.msra.mxu0 0.0
    %719 = vmatprep.subr.mxu0 0.0
    %720 = vmatpush1.msra.mxu0 0.0
    %721 = vmatprep.subr.mxu0 0.0
    %722 = vmatpush1.msra.mxu0 0.0
    %723 = vmatprep.subr.mxu0 0.0
    %724 = vmatpush1.msra.mxu0 0.0
    %725 = vmatprep.subr.mxu0 0.0
    %726 = vmatpush1.msra.mxu0 0.0
    %727 = vmatprep.subr.mxu0 0.0
    %728 = vmatpush1.msra.mxu0 0.0
    %729 = vmatprep.subr.mxu0 0.0
    %730 = vmatpush1.msra.mxu0 0.0
    %731 = vmatprep.subr.mxu0 0.0
    %732 = vmatpush1.msra.mxu0 0.0
    %733 = vmatprep.subr.mxu0 0.0
    %734 = vmatpush1.msra.mxu0 0.0
    %735 = vmatprep.mubr.f32.mxu0 0.0
    %736 = vmatmul.mubr.f32.gmra.mrb[0].mxu0 %v666
    %v737 = vpop.f32.mrb[0].mxu0
    %v738 = vadd.f32 %v664, %v737
    %v739 = vpop.f32.mrb[0].mxu0
    %740 = vmatprep.mubr.f32.mxu0 0.0
    %741 = vmatmul.mubr.f32.gmra.mrb[0].mxu0 %v669
    %v742 = vpop.f32.mrb[0].mxu0
    %v743 = vadd.f32 %v664, %v742
    %v744 = vpop.f32.mrb[0].mxu0
    %745 = vdwg.mxu0
    %v746 = vadd.f32 %v558, %v738
    %v747 = vadd.f32 %v559, %v743
    %v748 = vsel %vm147, %v746, 0.0
    %749 = vadd.xlane.f32.xlu0 %v748
    %v750 = vpop.xlane.xlu0 %749
    %v751 = vsel %vm147, %v747, 0.0
    %752 = vadd.xlane.f32.xlu0 %v751
    %v753 = vpop.xlane.xlu0 %752
    %v754 = vmul.f32 %v750, %v154
    %v755 = vmul.f32 %v753, %v154
    %v756 = vmul.f32 %v746, %v746
    %v757 = vmul.f32 %v747, %v747
    %v758 = vsel %vm147, %v756, 0.0
    %759 = vadd.xlane.f32.xlu0 %v758
    %v760 = vpop.xlane.xlu0 %759
    %v761 = vsel %vm147, %v757, 0.0
    %762 = vadd.xlane.f32.xlu0 %v761
    %v763 = vpop.xlane.xlu0 %762
    %v764 = vmul.f32 %v760, %v154
    %v765 = vmul.f32 %v763, %v154
    %v766 = vmul.f32 %v754, %v754
    %v767 = vmul.f32 %v755, %v755
    %v768 = vsub.f32 %v764, %v766
    %v769 = vsub.f32 %v765, %v767
    %v770 = vsub.f32 %v746, %v754
    %v771 = vsub.f32 %v747, %v755
    %v772 = vadd.f32 %v768, 1e-05
    %v773 = vadd.f32 %v769, 1e-05
    %v774 = vrsqrt.pop %v772
    %v775 = vrsqrt.pop %v773
    %v776 = vmul.f32 %v770, %v774
    %v777 = vmul.f32 %v771, %v775
    %v778 = vld [vmem:[#allocation7 + $0xc] sm:$0x1]
    %v779 = vlaneseq
    %v780 = vshrl.u32 %v779, 7
    %v781 = vsub.s32 0, %v780
    %v782 = vrot.slane %v778, %v781
    %v783 = vmul.f32 %v776, %v782
    %v784 = vmul.f32 %v777, %v782
    %v785 = vld [vmem:[#allocation7 + $0xd] sm:$0x1]
    %v786 = vlaneseq
    %v787 = vshrl.u32 %v786, 7
    %v788 = vsub.s32 0, %v787
    %v789 = vrot.slane %v785, %v788
    %v790 = vadd.f32 %v783, %v789
    %v791 = vadd.f32 %v784, %v789
    %v792 = vld [vmem:[#allocation5 + $0xf0] sm:$0xff]
    %v793 = vld [vmem:[#allocation5 + $0xf8] sm:$0xff]
    %v794 = vld [vmem:[#allocation5 + $0x100] sm:$0xff]
    %v795 = vld [vmem:[#allocation5 + $0x108] sm:$0xff]
    %v796 = vld [vmem:[#allocation7 + $0xe] sm:$0x1]
    %v797 = vlaneseq
    %v798 = vshrl.u32 %v797, 7
    %v799 = vsub.s32 0, %v798
    %v800 = vrot.slane %v796, %v799
    %v802 = vsel %vm147, %v790, 0
    %v805 = vsel %vm147, %v791, 0
    %807 = vmatprep.subr.mxu0 0.0
    %808 = vmatpush1.msra.mxu0 %v792
    %809 = vmatprep.subr.mxu0 0.0
    %810 = vmatpush1.msra.mxu0 %v793
    %811 = vmatprep.subr.mxu0 0.0
    %812 = vmatpush1.msra.mxu0 %v794
    %813 = vmatprep.subr.mxu0 0.0
    %814 = vmatpush1.msra.mxu0 %v795
    %815 = vmatprep.subr.mxu0 0.0
    %816 = vmatpush1.msra.mxu0 0.0
    %817 = vmatprep.subr.mxu0 0.0
    %818 = vmatpush1.msra.mxu0 0.0
    %819 = vmatprep.subr.mxu0 0.0
    %820 = vmatpush1.msra.mxu0 0.0
    %821 = vmatprep.subr.mxu0 0.0
    %822 = vmatpush1.msra.mxu0 0.0
    %823 = vmatprep.subr.mxu0 0.0
    %824 = vmatpush1.msra.mxu0 0.0
    %825 = vmatprep.subr.mxu0 0.0
    %826 = vmatpush1.msra.mxu0 0.0
    %827 = vmatprep.subr.mxu0 0.0
    %828 = vmatpush1.msra.mxu0 0.0
    %829 = vmatprep.subr.mxu0 0.0
    %830 = vmatpush1.msra.mxu0 0.0
    %831 = vmatprep.subr.mxu0 0.0
    %832 = vmatpush1.msra.mxu0 0.0
    %833 = vmatprep.subr.mxu0 0.0
    %834 = vmatpush1.msra.mxu0 0.0
    %835 = vmatprep.subr.mxu0 0.0
    %836 = vmatpush1.msra.mxu0 0.0
    %837 = vmatprep.subr.mxu0 0.0
    %838 = vmatpush1.msra.mxu0 0.0
    %839 = vmatprep.subr.mxu0 0.0
    %840 = vmatpush1.msra.mxu0 0.0
    %841 = vmatprep.subr.mxu0 0.0
    %842 = vmatpush1.msra.mxu0 0.0
    %843 = vmatprep.subr.mxu0 0.0
    %844 = vmatpush1.msra.mxu0 0.0
    %845 = vmatprep.subr.mxu0 0.0
    %846 = vmatpush1.msra.mxu0 0.0
    %847 = vmatprep.subr.mxu0 0.0
    %848 = vmatpush1.msra.mxu0 0.0
    %849 = vmatprep.subr.mxu0 0.0
    %850 = vmatpush1.msra.mxu0 0.0
    %851 = vmatprep.subr.mxu0 0.0
    %852 = vmatpush1.msra.mxu0 0.0
    %853 = vmatprep.subr.mxu0 0.0
    %854 = vmatpush1.msra.mxu0 0.0
    %855 = vmatprep.subr.mxu0 0.0
    %856 = vmatpush1.msra.mxu0 0.0
    %857 = vmatprep.subr.mxu0 0.0
    %858 = vmatpush1.msra.mxu0 0.0
    %859 = vmatprep.subr.mxu0 0.0
    %860 = vmatpush1.msra.mxu0 0.0
    %861 = vmatprep.subr.mxu0 0.0
    %862 = vmatpush1.msra.mxu0 0.0
    %863 = vmatprep.subr.mxu0 0.0
    %864 = vmatpush1.msra.mxu0 0.0
    %865 = vmatprep.subr.mxu0 0.0
    %866 = vmatpush1.msra.mxu0 0.0
    %867 = vmatprep.subr.mxu0 0.0
    %868 = vmatpush1.msra.mxu0 0.0
    %869 = vmatprep.subr.mxu0 0.0
    %870 = vmatpush1.msra.mxu0 0.0
    %871 = vmatprep.mubr.f32.mxu0 0.0
    %872 = vmatmul.mubr.f32.gmra.mrb[0].mxu0 %v802
    %v873 = vpop.f32.mrb[0].mxu0
    %v874 = vadd.f32 %v800, %v873
    %v875 = vpop.f32.mrb[0].mxu0
    %876 = vmatprep.mubr.f32.mxu0 0.0
    %877 = vmatmul.mubr.f32.gmra.mrb[0].mxu0 %v805
    %v878 = vpop.f32.mrb[0].mxu0
    %v879 = vadd.f32 %v800, %v878
    %v880 = vpop.f32.mrb[0].mxu0
    %881 = vdwg.mxu0
    %v882 = vmax.f32 %v874, 0.0
    %v883 = vmax.f32 %v879, 0.0
    %v884 = vld [vmem:[#allocation5 + $0x110] sm:$0xff]
    %v885 = vld [vmem:[#allocation5 + $0x118] sm:$0xff]
    %v886 = vld [vmem:[#allocation5 + $0x120] sm:$0xff]
    %v887 = vld [vmem:[#allocation5 + $0x128] sm:$0xff]
    %v888 = vld [vmem:[#allocation5 + $0x130] sm:$0xff]
    %v889 = vld [vmem:[#allocation5 + $0x138] sm:$0xff]
    %v890 = vld [vmem:[#allocation5 + $0x140] sm:$0xff]
    %v891 = vld [vmem:[#allocation5 + $0x148] sm:$0xff]
    %v892 = vld [vmem:[#allocation7 + $0xf] sm:$0x1]
    %v893 = vlaneseq
    %v894 = vshrl.u32 %v893, 7
    %v895 = vsub.s32 0, %v894
    %v896 = vrot.slane %v892, %v895
    %v898 = vsel %vm298, %v882, 0
    %v901 = vsel %vm298, %v883, 0
    %903 = vmatprep.subr.mxu0 0.0
    %904 = vmatpush1.msra.mxu0 %v884
    %905 = vmatprep.subr.mxu0 0.0
    %906 = vmatpush1.msra.mxu0 %v885
    %907 = vmatprep.subr.mxu0 0.0
    %908 = vmatpush1.msra.mxu0 %v886
    %909 = vmatprep.subr.mxu0 0.0
    %910 = vmatpush1.msra.mxu0 %v887
    %911 = vmatprep.subr.mxu0 0.0
    %912 = vmatpush1.msra.mxu0 %v888
    %913 = vmatprep.subr.mxu0 0.0
    %914 = vmatpush1.msra.mxu0 %v889
    %915 = vmatprep.subr.mxu0 0.0
    %916 = vmatpush1.msra.mxu0 %v890
    %917 = vmatprep.subr.mxu0 0.0
    %918 = vmatpush1.msra.mxu0 %v891
    %919 = vmatprep.subr.mxu0 0.0
    %920 = vmatpush1.msra.mxu0 0.0
    %921 = vmatprep.subr.mxu0 0.0
    %922 = vmatpush1.msra.mxu0 0.0
    %923 = vmatprep.subr.mxu0 0.0
    %924 = vmatpush1.msra.mxu0 0.0
    %925 = vmatprep.subr.mxu0 0.0
    %926 = vmatpush1.msra.mxu0 0.0
    %927 = vmatprep.subr.mxu0 0.0
    %928 = vmatpush1.msra.mxu0 0.0
    %929 = vmatprep.subr.mxu0 0.0
    %930 = vmatpush1.msra.mxu0 0.0
    %931 = vmatprep.subr.mxu0 0.0
    %932 = vmatpush1.msra.mxu0 0.0
    %933 = vmatprep.subr.mxu0 0.0
    %934 = vmatpush1.msra.mxu0 0.0
    %935 = vmatprep.subr.mxu0 0.0
    %936 = vmatpush1.msra.mxu0 0.0
    %937 = vmatprep.subr.mxu0 0.0
    %938 = vmatpush1.msra.mxu0 0.0
    %939 = vmatprep.subr.mxu0 0.0
    %940 = vmatpush1.msra.mxu0 0.0
    %941 = vmatprep.subr.mxu0 0.0
    %942 = vmatpush1.msra.mxu0 0.0
    %943 = vmatprep.subr.mxu0 0.0
    %944 = vmatpush1.msra.mxu0 0.0
    %945 = vmatprep.subr.mxu0 0.0
    %946 = vmatpush1.msra.mxu0 0.0
    %947 = vmatprep.subr.mxu0 0.0
    %948 = vmatpush1.msra.mxu0 0.0
    %949 = vmatprep.subr.mxu0 0.0
    %950 = vmatpush1.msra.mxu0 0.0
    %951 = vmatprep.subr.mxu0 0.0
    %952 = vmatpush1.msra.mxu0 0.0
    %953 = vmatprep.subr.mxu0 0.0
    %954 = vmatpush1.msra.mxu0 0.0
    %955 = vmatprep.subr.mxu0 0.0
    %956 = vmatpush1.msra.mxu0 0.0
    %957 = vmatprep.subr.mxu0 0.0
    %958 = vmatpush1.msra.mxu0 0.0
    %959 = vmatprep.subr.mxu0 0.0
    %960 = vmatpush1.msra.mxu0 0.0
    %961 = vmatprep.subr.mxu0 0.0
    %962 = vmatpush1.msra.mxu0 0.0
    %963 = vmatprep.subr.mxu0 0.0
    %964 = vmatpush1.msra.mxu0 0.0
    %965 = vmatprep.subr.mxu0 0.0
    %966 = vmatpush1.msra.mxu0 0.0
    %967 = vmatprep.mubr.f32.mxu0 0.0
    %968 = vmatmul.mubr.f32.gmra.mrb[0].mxu0 %v898
    %v969 = vpop.f32.mrb[0].mxu0
    %v970 = vadd.f32 %v896, %v969
    %v971 = vpop.f32.mrb[0].mxu0
    %972 = vmatprep.mubr.f32.mxu0 0.0
    %973 = vmatmul.mubr.f32.gmra.mrb[0].mxu0 %v901
    %v974 = vpop.f32.mrb[0].mxu0
    %v975 = vadd.f32 %v896, %v974
    %v976 = vpop.f32.mrb[0].mxu0
    %977 = vdwg.mxu0
    %978 = vst [vmem:[#allocation8] sm:$0xff] %v970
    %979 = vst [vmem:[#allocation8 + $0x8] sm:$0xff] %v975
    // Predicated region
    $region26: #{tpu_custom_call.1} parent=1 // pred_check
      _
    $region27: #{tpu_custom_call.1} parent=1 // pred_check_branch
      %981 = sbr.rel (0) target = $region29
    $region28: #{tpu_custom_call.1} parent=1 // pred_region
      %s983 = ssub.s32 256, 256
      %984 = vsyncadd [#allocation4], %s983
      %s985 = sshll.u32 [#allocation8], 4
      %s986 = int_to_ptr.vmem [resolvable:$true] %s985
      %991 = dma.vmem_to_hbm [thread:$0]  %s986, 256, %s3, [#allocation4], 128, 128, 8
    $region29: #{tpu_custom_call.1} parent=1 // pred_fallthru
      _
    // Predicated region
    $region30: #{tpu_custom_call.1} parent=1 // pred_check
      _
    $region31: #{tpu_custom_call.1} parent=1 // pred_check_branch
      %993 = sbr.rel (0) target = $region33
    $region32: #{tpu_custom_call.1} parent=1 // pred_region
      %994 = dma.done [#allocation4], 256
    $region33: #{tpu_custom_call.1} parent=1 // pred_fallthru
      _
    %995 = vsyncpa [#allocation3], 1
    %996 = vsyncpa [#allocation6], 1
    %997 = vsyncpa [#allocation4], 1

</llo_original>
